<compile_context>
chip_gen: v7x
topology: tpu7x:2x2x1
jax: 0.10.0
libtpu: 0.0.40
codegen_flags: <defaults>
</compile_context>

<pallas_src>
import functools
import numpy as np
import jax
import jax.numpy as jnp
from jax.experimental import pallas as pl
from jax.experimental.pallas import tpu as pltpu

LANE = 128
TM_MAX = 512                       # output-row tile cap
TN_MAX = 256                       # output-col tile cap (matches 256-wide MXU)
VMEM_LIMIT = 48 * 1024 * 1024      # safe on v5e/v6e (128 MiB) and v7x (64 MiB physical)
FUSED3X3_VMEM_BUDGET = 40 * 1024 * 1024


def _ceil_to(x, m):
    return ((x + m - 1) // m) * m


def _cpad(c):
    return _ceil_to(c, LANE)


# ----------------------------------------------------------------------------
# Pallas kernels
# ----------------------------------------------------------------------------
def _mm_kernel(a_ref, w_ref, b_ref, o_ref, *, relu):
    """o = relu?(A @ W + b); A,W bf16, f32 MXU accumulation, bf16 store."""
    acc = jnp.dot(a_ref[...], w_ref[...], preferred_element_type=jnp.float32)
    r = acc + b_ref[...]
    if relu:
        r = jnp.maximum(r, 0.0)
    o_ref[...] = r.astype(o_ref.dtype)


def _mm_residual_kernel(a_ref, w_ref, b_ref, s_ref, o_ref):
    """o = relu(A @ W + b + shortcut) -- fused bottleneck conv3 epilogue."""
    acc = jnp.dot(a_ref[...], w_ref[...], preferred_element_type=jnp.float32)
    r = acc + b_ref[...] + s_ref[...].astype(jnp.float32)
    o_ref[...] = jnp.maximum(r, 0.0).astype(o_ref.dtype)


def _conv3x3_kernel(x_ref, w_ref, b_ref, o_ref, *, H, W, Cp, relu):
    """Fused stride-1 3x3 conv: 9 taps accumulated as 9 MXU matmuls (no HBM im2col).

    x_ref: (1, H+2, W+2, Cp) bf16 (spatially padded, channel padded)
    w_ref: (9*Cp, TCo) bf16 (tap-major, BN-folded)   b_ref: (1, TCo) f32
    o_ref: (1, H, W, TCo) bf16
    """
    acc = None
    for t in range(9):
        di, dj = t // 3, t % 3
        xt = x_ref[0, di:di + H, dj:dj + W, :].reshape(H * W, Cp)
        p = jnp.dot(xt, w_ref[t * Cp:(t + 1) * Cp, :],
                    preferred_element_type=jnp.float32)
        acc = p if acc is None else acc + p
    r = acc + b_ref[...]
    if relu:
        r = jnp.maximum(r, 0.0)
    o_ref[0] = r.reshape(H, W, r.shape[-1]).astype(o_ref.dtype)


def _maxpool_kernel(x_ref, o_ref, *, Ho, Wo, Cp):
    """3x3/s2 max pool on a layout with H parity split out and W parity folded into
    the lane axis -> every tap is a unit shift, every store is lane-dense."""
    r = None
    for di in range(3):
        for dj in range(3):
            a, oi = di % 2, di // 2
            b, oj = dj % 2, dj // 2
            t = x_ref[0, oi:oi + Ho, a, oj:oj + Wo, b * Cp:(b + 1) * Cp]
            r = t if r is None else jnp.maximum(r, t)
    o_ref[0] = r


# ----------------------------------------------------------------------------
# Pallas wrappers
# ----------------------------------------------------------------------------
def fused_matmul(a, w, b, shortcut=None, relu=True):
    """a:(M,K) bf16, w:(K,Np) bf16 (pre-padded at init), b:(1,Np) f32,
    shortcut:(M,Np) bf16 or None  ->  (M,Np) bf16 (channels stay padded)."""
    M, K = a.shape
    Kw, Np = w.shape
    assert K == Kw, (K, Kw)
    TN = TN_MAX if Np % TN_MAX == 0 else LANE

    pad_m = 0
    if M <= TM_MAX:
        TM = M                                 # single full row block
    else:
        TM = next((t for t in range(TM_MAX, 7, -8) if M % t == 0), None)
        if TM is None:                         # rare ragged M: pad up to multiple of 8
            Mp = _ceil_to(M, 8)
            pad_m = Mp - M
            a = jnp.pad(a, ((0, pad_m), (0, 0)))
            if shortcut is not None:
                shortcut = jnp.pad(shortcut, ((0, pad_m), (0, 0)))
            M = Mp
            TM = next(t for t in range(TM_MAX, 7, -8) if M % t == 0)

    # col tiles outer / row tiles inner -> weight block fetched once per col tile
    grid = (Np // TN, M // TM)
    in_specs = [
        pl.BlockSpec((TM, K), lambda j, i: (i, 0)),
        pl.BlockSpec((K, TN), lambda j, i: (0, j)),
        pl.BlockSpec((1, TN), lambda j, i: (0, j)),
    ]
    args = [a, w, b]
    if shortcut is not None:
        in_specs.append(pl.BlockSpec((TM, TN), lambda j, i: (i, j)))
        args.append(shortcut)
        kernel = _mm_residual_kernel
    else:
        kernel = functools.partial(_mm_kernel, relu=relu)

    out = pl.pallas_call(
        kernel,
        out_shape=jax.ShapeDtypeStruct((M, Np), jnp.bfloat16),
        grid_spec=pltpu.PrefetchScalarGridSpec(
            num_scalar_prefetch=0,
            grid=grid,
            in_specs=in_specs,
            out_specs=pl.BlockSpec((TM, TN), lambda j, i: (i, j)),
        ),
        compiler_params=pltpu.CompilerParams(
            dimension_semantics=("parallel", "parallel"),
            vmem_limit_bytes=VMEM_LIMIT),
    )(*args)
    return out if pad_m == 0 else out[:M - pad_m]


def conv3x3_s1_fused(x, p, relu=True):
    """Stride-1 3x3 conv via the fused tap-accumulation kernel."""
    N, H, W, Cp = x.shape
    Cop = p["w"].shape[1]
    TCo = TN_MAX if Cop % TN_MAX == 0 else LANE
    xp = jnp.pad(x, ((0, 0), (1, 1), (1, 1), (0, 0)))
    kern = functools.partial(_conv3x3_kernel, H=H, W=W, Cp=Cp, relu=relu)
    return pl.pallas_call(
        kern,
        out_shape=jax.ShapeDtypeStruct((N, H, W, Cop), jnp.bfloat16),
        grid_spec=pltpu.PrefetchScalarGridSpec(
            num_scalar_prefetch=0,
            grid=(Cop // TCo, N),                    # co tiles outer, batch inner
            in_specs=[
                pl.BlockSpec((1, H + 2, W + 2, Cp), lambda j, n: (n, 0, 0, 0)),
                pl.BlockSpec((9 * Cp, TCo), lambda j, n: (0, j)),
                pl.BlockSpec((1, TCo), lambda j, n: (0, j)),
            ],
            out_specs=pl.BlockSpec((1, H, W, TCo), lambda j, n: (n, 0, 0, j)),
        ),
        compiler_params=pltpu.CompilerParams(
            dimension_semantics=("parallel", "parallel"),
            vmem_limit_bytes=VMEM_LIMIT),
    )(xp, p["w"], p["b"])


def maxpool_3x3_s2(x):
    """3x3 max pool, stride 2, padding 1 (pad value -inf), bf16 NHWC, lane-dense."""
    N, H, W, Cp = x.shape
    Ho = (H - 1) // 2 + 1
    Wo = (W - 1) // 2 + 1
    Hp, Wp = 2 * (Ho + 1), 2 * (Wo + 1)
    xp = jnp.pad(x, ((0, 0), (1, Hp - 1 - H), (1, Wp - 1 - W), (0, 0)),
                 constant_values=-jnp.inf)
    # free row-major reshape: split H parity, fold W parity into the lane axis
    xr = xp.reshape(N, Ho + 1, 2, Wo + 1, 2 * Cp)
    kern = functools.partial(_maxpool_kernel, Ho=Ho, Wo=Wo, Cp=Cp)
    return pl.pallas_call(
        kern,
        out_shape=jax.ShapeDtypeStruct((N, Ho, Wo, Cp), x.dtype),
        grid_spec=pltpu.PrefetchScalarGridSpec(
            num_scalar_prefetch=0,
            grid=(N,),
            in_specs=[pl.BlockSpec((1, Ho + 1, 2, Wo + 1, 2 * Cp),
                                   lambda n: (n, 0, 0, 0, 0))],
            out_specs=pl.BlockSpec((1, Ho, Wo, Cp), lambda n: (n, 0, 0, 0)),
        ),
        compiler_params=pltpu.CompilerParams(
            dimension_semantics=("parallel",),
            vmem_limit_bytes=VMEM_LIMIT),
    )(xr)


# ----------------------------------------------------------------------------
# Glue (plain JAX): im2col fallback, conv dispatcher, pooling
# ----------------------------------------------------------------------------
def _im2col(x, k, stride, pad, extra_k_pad=0):
    """bf16 patch matrix from (already channel-padded) NHWC x; K is lane-aligned."""
    N, H, W, Cp = x.shape
    Ho = (H + 2 * pad - k) // stride + 1
    Wo = (W + 2 * pad - k) // stride + 1
    xp = jnp.pad(x, ((0, 0), (pad, pad), (pad, pad), (0, 0)))
    cols = [xp[:, i:i + stride * Ho:stride, j:j + stride * Wo:stride, :]
            for i in range(k) for j in range(k)]
    if extra_k_pad:
        cols.append(jnp.zeros((N, Ho, Wo, extra_k_pad), x.dtype))
    patches = jnp.concatenate(cols, axis=-1)
    return patches.reshape(N * Ho * Wo, patches.shape[-1]), (Ho, Wo)


def _fused3x3_fits(H, W, cp, tco):
    in_blk = (H + 2) * (W + 2) * cp * 2
    out_blk = H * W * tco * 2
    w_blk = 9 * cp * tco * 2
    acc = H * W * tco * 4
    est = 2 * (in_blk + out_blk + w_blk) + 2 * acc + 2 * H * W * cp * 2
    return est <= FUSED3X3_VMEM_BUDGET


def conv_bn(x, p, stride=1, relu=True, shortcut=None):
    """Conv + folded eval BN (+ ReLU) (+ fused residual for 1x1 expand)."""
    cop = p["w"].shape[1]
    N, H, W, cp = x.shape
    if p["k"] == 1:
        a = x.reshape(N * H * W, cp)
        sc = None if shortcut is None else shortcut.reshape(N * H * W, cop)
        out = fused_matmul(a, p["w"], p["b"], shortcut=sc, relu=relu)
        return out.reshape(N, H, W, cop)
    assert shortcut is None
    tco = TN_MAX if cop % TN_MAX == 0 else LANE
    use_fused = (stride == 1 and p["w"].shape[0] == 9 * cp and W % 8 == 0
                 and _fused3x3_fits(H, W, cp, tco))
    if use_fused:
        return conv3x3_s1_fused(x, p, relu=relu)
    # stride-2 (or small/odd-width) 3x3: bf16 im2col, K already lane-aligned
    extra = p["w"].shape[0] - 9 * cp
    a, (Ho, Wo) = _im2col(x, 3, stride, 1, extra_k_pad=extra)
    out = fused_matmul(a, p["w"], p["b"], relu=relu)
    return out.reshape(N, Ho, Wo, cop)


def avg_pool_2x2(x):
    # TODO(synk): timm uses AvgPool2d(2, 2, ceil_mode=True); equivalent for even dims.
    N, H, W, C = x.shape
    y = x.astype(jnp.float32).reshape(N, H // 2, 2, W // 2, 2, C).mean(axis=(2, 4))
    return y.astype(jnp.bfloat16)


# ----------------------------------------------------------------------------
# Deterministic parameter init (shapes match timm resnet50d, fc -> 2 classes).
# Weights are BN-folded, cast to bf16 and channel/lane padded ONCE here.
# ----------------------------------------------------------------------------
def make_conv_bn_params(key, cin, cout, k, *, pad_cin=True):
    k1, k2, k3 = jax.random.split(key, 3)
    w = jax.random.normal(k1, (k, k, cin, cout), jnp.float32) / np.sqrt(k * k * cin)
    gamma = 1.0 + 0.1 * jax.random.normal(k2, (cout,), jnp.float32)
    beta = 0.1 * jax.random.normal(k3, (cout,), jnp.float32)
    scale = gamma / jnp.sqrt(1.0 + 1e-5)          # eval BN (mean=0, var=1) folded in
    w = w * scale
    cpo = _cpad(cout)
    if pad_cin:
        # per-tap channel padding: matches channel-padded activations (fused 3x3 + 1x1)
        cpi = _cpad(cin)
        w = jnp.pad(w, ((0, 0), (0, 0), (0, cpi - cin), (0, cpo - cout)))
        w = w.reshape(k * k * cpi, cpo)
    else:
        # dense K then lane pad (stem conv1: raw 3-channel input, im2col K = 27 -> 128)
        w = w.reshape(k * k * cin, cout)
        kp = _cpad(k * k * cin)
        w = jnp.pad(w, ((0, kp - k * k * cin), (0, cpo - cout)))
    b = jnp.pad(beta.reshape(1, -1), ((0, 0), (0, cpo - cout)))
    return {"w": w.astype(jnp.bfloat16), "b": b, "k": k}


def init_params(key, num_classes=2):
    keys = iter(jax.random.split(key, 256))
    params = {}
    # deep stem (resnet-d): 3x3 s2 (3->32), 3x3 (32->32), 3x3 (32->64), each +BN+ReLU
    params["stem"] = [
        make_conv_bn_params(next(keys), 3, 32, 3, pad_cin=False),
        make_conv_bn_params(next(keys), 32, 32, 3),
        make_conv_bn_params(next(keys), 32, 64, 3),
    ]
    in_ch = 64
    stages = []
    for planes, n_blocks, stride in [(64, 3, 1), (128, 4, 2), (256, 6, 2), (512, 3, 2)]:
        blocks = []
        out_ch = planes * 4
        for bi in range(n_blocks):
            s = stride if bi == 0 else 1
            blk = {
                "conv1": make_conv_bn_params(next(keys), in_ch, planes, 1),
                "conv2": make_conv_bn_params(next(keys), planes, planes, 3),
                "conv3": make_conv_bn_params(next(keys), planes, out_ch, 1),
                "stride": s,
            }
            if bi == 0 and (s != 1 or in_ch != out_ch):
                # resnet-d downsample: AvgPool2d(2,2) (if stride>1) + 1x1 conv + BN
                blk["down"] = make_conv_bn_params(next(keys), in_ch, out_ch, 1)
            blocks.append(blk)
            in_ch = out_ch
        stages.append(blocks)
    params["stages"] = stages
    kf1, kf2 = jax.random.split(next(keys))
    params["fc_w"] = jax.random.normal(kf1, (in_ch, num_classes), jnp.float32) / np.sqrt(in_ch)
    params["fc_b"] = 0.01 * jax.random.normal(kf2, (num_classes,), jnp.float32)
    return params


# ----------------------------------------------------------------------------
# Forward
# ----------------------------------------------------------------------------
def bottleneck(x, blk):
    s = blk["stride"]
    out = conv_bn(x, blk["conv1"], 1, relu=True)        # 1x1 reduce
    out = conv_bn(out, blk["conv2"], s, relu=True)      # 3x3 (stride here, resnet-b/d)
    if "down" in blk:
        sc = avg_pool_2x2(x) if s != 1 else x
        sc = conv_bn(sc, blk["down"], 1, relu=False)
    else:
        sc = x
    # 1x1 expand with fused bias + residual add + ReLU epilogue
    return conv_bn(out, blk["conv3"], 1, relu=True, shortcut=sc)


def resnet50d_forward(params, x_nchw):
    x = jnp.transpose(x_nchw, (0, 2, 3, 1)).astype(jnp.bfloat16)   # NCHW -> NHWC bf16
    s1, s2, s3 = params["stem"]
    x = conv_bn(x, s1, 2, relu=True)
    x = conv_bn(x, s2, 1, relu=True)
    x = conv_bn(x, s3, 1, relu=True)
    x = maxpool_3x3_s2(x)
    for stage in params["stages"]:
        for blk in stage:
            x = bottleneck(x, blk)
    feat = x.astype(jnp.float32).mean(axis=(1, 2))                 # global average pool
    # tiny (N,2048)@(2048,2) classifier: bypasses the Pallas path on purpose
    logits = jnp.dot(feat, params["fc_w"]) + params["fc_b"]
    return logits                                                   # (N, 2) f32


if __name__ == "__main__":
    key = jax.random.PRNGKey(0)
    k_param, k_x = jax.random.split(key)
    params = init_params(k_param, num_classes=2)
    # small input consistent with the module: (batch=2, channels=3, 32x32 image)
    x = jax.random.normal(k_x, (2, 3, 32, 32), jnp.float32)
    logits = resnet50d_forward(params, x)
    logits = jax.block_until_ready(logits)
    assert logits.shape == (2, 2) and logits.dtype == jnp.float32
    assert bool(jnp.all(jnp.isfinite(logits)))
    print("KERNEL_OK")
</pallas_src>

<mosaic_0001>
module attributes {stable_mosaic.version = 11 : i64} {
  func.func @_mm_kernel(%arg0: i32, %arg1: i32, %arg2: memref<512x128xbf16, #tpu.memory_space<vmem>>, %arg3: memref<128x128xbf16, #tpu.memory_space<vmem>>, %arg4: memref<1x128xf32, #tpu.memory_space<vmem>>, %arg5: memref<512x128xbf16, #tpu.memory_space<vmem>>) attributes {dimension_semantics = [#tpu.dimension_semantics<parallel>, #tpu.dimension_semantics<parallel>], iteration_bounds = array<i64: 1, 1>, scalar_prefetch = 0 : i64, scratch_operands = 0 : i64, tpu.core_type = #tpu.core_type<tc>, window_params = [{transform_indices = @transform_0, window_bounds = array<i64: 512, 128>}, {transform_indices = @transform_1, window_bounds = array<i64: 128, 128>}, {transform_indices = @transform_2, window_bounds = array<i64: 1, 128>}, {transform_indices = @transform_3, window_bounds = array<i64: 512, 128>}]} {
    %c0 = arith.constant 0 : index
    %c0_0 = arith.constant 0 : index
    %0 = vector.load %arg2[%c0, %c0_0] : memref<512x128xbf16, #tpu.memory_space<vmem>>, vector<512x128xbf16>
    %c0_1 = arith.constant 0 : index
    %c0_2 = arith.constant 0 : index
    %1 = vector.load %arg3[%c0_1, %c0_2] : memref<128x128xbf16, #tpu.memory_space<vmem>>, vector<128x128xbf16>
    %cst = arith.constant dense<0.000000e+00> : vector<512x128xf32>
    %2 = tpu.matmul %0, %1, %cst {dimension_numbers = #tpu.dot_dimension_numbers<[1], [0], [0], [1], [0, 0, 1, 1], [], []>} : vector<512x128xbf16>, vector<128x128xbf16>, vector<512x128xf32> -> vector<512x128xf32>
    %c0_3 = arith.constant 0 : index
    %c0_4 = arith.constant 0 : index
    %3 = vector.load %arg4[%c0_3, %c0_4] : memref<1x128xf32, #tpu.memory_space<vmem>>, vector<1x128xf32>
    %4 = vector.broadcast %3 : vector<1x128xf32> to vector<512x128xf32>
    %5 = arith.addf %2, %4 : vector<512x128xf32>
    %cst_5 = arith.constant 0.000000e+00 : f32
    %6 = vector.broadcast %cst_5 : f32 to vector<512x128xf32>
    %7 = arith.maximumf %5, %6 : vector<512x128xf32>
    %8 = arith.truncf %7 : vector<512x128xf32> to vector<512x128xbf16>
    %c0_6 = arith.constant 0 : index
    %c0_7 = arith.constant 0 : index
    %9 = vector.load %arg5[%c0_6, %c0_7] : memref<512x128xbf16, #tpu.memory_space<vmem>>, vector<512x128xbf16>
    tpu.vector_store %arg5[%c0_6, %c0_7], %8 {strides = array<i32>} : memref<512x128xbf16, #tpu.memory_space<vmem>>, vector<512x128xbf16>,
    return
  }
  func.func @transform_0(%arg0: i32, %arg1: i32) -> (i32, i32) {
    %c0_i32 = arith.constant 0 : i32
    %c0_i32_0 = arith.constant 0 : i32
    return %arg1, %c0_i32 : i32, i32
  }
  func.func @transform_1(%arg0: i32, %arg1: i32) -> (i32, i32) {
    %c0_i32 = arith.constant 0 : i32
    %c0_i32_0 = arith.constant 0 : i32
    return %c0_i32, %arg0 : i32, i32
  }
  func.func @transform_2(%arg0: i32, %arg1: i32) -> (i32, i32) {
    %c0_i32 = arith.constant 0 : i32
    %c0_i32_0 = arith.constant 0 : i32
    return %c0_i32, %arg0 : i32, i32
  }
  func.func @transform_3(%arg0: i32, %arg1: i32) -> (i32, i32) {
    %c0_i32 = arith.constant 0 : i32
    return %arg1, %arg0 : i32, i32
  }
}

</mosaic_0001>

<llo_original>
// kernel: tpu_custom_call.1
$region0: #{tpu_custom_call.1}
  #allocation0 [shape = 'u32[]', space=smem, size = 0x4, offset = 0x4, fixed_abs, tag = 'smem constant byte address 0x4 - core index']
  #allocation1 [shape = 'u32[144,128]{1,0:T(1,128)}', space=vmem, size = 0x12000, scoped, tag = 'internal scratch']
  %s0 = inlined_call_operand.hbm [shape: bf16[512,128], index: 0, kind: input, shape index: {}]
  %s1 = inlined_call_operand.hbm [shape: bf16[128,128], index: 1, kind: input, shape index: {}]
  %s2 = inlined_call_operand.vmem [shape: f32[1,128], index: 2, kind: input, shape index: {}]
  %s3 = inlined_call_operand.hbm [shape: bf16[512,128], index: 3, kind: output, shape index: {}]
  %s4 = sld [smem:[#allocation0]]
  $region30: #{tpu_custom_call.1} parent=0
    _
  %s6 = ssub.s32 1, %s4
  %s7 = scalar_select 0, %s6, %s4
  $region1: #{tpu_custom_call.1} parent=0
    #allocation2 [shape = 'u8[131072]{0}', space=vmem, size = 0x20000, scoped, tag = 'input window, operand 0, single buffered']
    #allocation3 [shape = 's32[1]{0}', space=sflag, size = 0x4, scoped, tag = 'scoped memory for tpu_custom_call.1']
    #allocation4 [shape = 's32[1]{0}', space=sflag, size = 0x4, scoped, tag = 'scoped memory for tpu_custom_call.1']
    #allocation5 [shape = 'u8[32768]{0}', space=vmem, size = 0x8000, scoped, tag = 'input window, operand 1, single buffered']
    #allocation6 [shape = 's32[1]{0}', space=sflag, size = 0x4, scoped, tag = 'scoped memory for tpu_custom_call.1']
    #allocation7 [shape = 'u8[131072]{0}', space=vmem, size = 0x20000, scoped, tag = 'output window, operand 0, single buffered']
    %8 = vsyncpa [#allocation3], 0
    %9 = vsyncpa [#allocation6], 0
    %10 = vsyncpa [#allocation4], 0
    // Predicated region
    $region2: #{tpu_custom_call.1} parent=1 // pred_check
      _
    $region3: #{tpu_custom_call.1} parent=1 // pred_check_branch
      %12 = sbr.rel (0) target = $region5
    $region4: #{tpu_custom_call.1} parent=1 // pred_region
      %s14 = ssub.s32 4096, 4096
      %15 = vsyncadd [#allocation3], %s14
      %s16 = sshll.u32 [#allocation2], 4
      %s17 = int_to_ptr.vmem [resolvable:$true] %s16
      %22 = dma.hbm_to_vmem [thread:$0]  %s0, 4096, %s17, [#allocation3], 64, 64, 4
    $region5: #{tpu_custom_call.1} parent=1 // pred_fallthru
      _
    // Predicated region
    $region6: #{tpu_custom_call.1} parent=1 // pred_check
      _
    $region7: #{tpu_custom_call.1} parent=1 // pred_check_branch
      %24 = sbr.rel (0) target = $region9
    $region8: #{tpu_custom_call.1} parent=1 // pred_region
      %s26 = ssub.s32 1024, 1024
      %27 = vsyncadd [#allocation6], %s26
      %s28 = sshll.u32 [#allocation5], 4
      %s29 = int_to_ptr.vmem [resolvable:$true] %s28
      %34 = dma.hbm_to_vmem [thread:$0]  %s1, 1024, %s29, [#allocation6], 64, 64, 4
    $region9: #{tpu_custom_call.1} parent=1 // pred_fallthru
      _
    // Predicated region
    $region10: #{tpu_custom_call.1} parent=1 // pred_check
      _
    $region11: #{tpu_custom_call.1} parent=1 // pred_check_branch
      %36 = sbr.rel (0) target = $region13
    $region12: #{tpu_custom_call.1} parent=1 // pred_region
      _
    $region13: #{tpu_custom_call.1} parent=1 // pred_fallthru
      _
    // Predicated region
    $region14: #{tpu_custom_call.1} parent=1 // pred_check
      _
    $region15: #{tpu_custom_call.1} parent=1 // pred_check_branch
      %38 = sbr.rel (0) target = $region17
    $region16: #{tpu_custom_call.1} parent=1 // pred_region
      %39 = dma.done [#allocation3], 4096
    $region17: #{tpu_custom_call.1} parent=1 // pred_fallthru
      _
    // Predicated region
    $region18: #{tpu_custom_call.1} parent=1 // pred_check
      _
    $region19: #{tpu_custom_call.1} parent=1 // pred_check_branch
      %41 = sbr.rel (0) target = $region21
    $region20: #{tpu_custom_call.1} parent=1 // pred_region
      %42 = dma.done [#allocation6], 1024
    $region21: #{tpu_custom_call.1} parent=1 // pred_fallthru
      _
    %v44 = vld [vmem:[#allocation2] sm:$0xf]
    %v45 = vld [vmem:[#allocation2 + $0x4] sm:$0xf]
    %v46 = vld [vmem:[#allocation2 + $0x8] sm:$0xf]
    %v47 = vld [vmem:[#allocation2 + $0xc] sm:$0xf]
    %v48 = vld [vmem:[#allocation2 + $0x10] sm:$0xf]
    %v49 = vld [vmem:[#allocation2 + $0x14] sm:$0xf]
    %v50 = vld [vmem:[#allocation2 + $0x18] sm:$0xf]
    %v51 = vld [vmem:[#allocation2 + $0x1c] sm:$0xf]
    %v52 = vld [vmem:[#allocation2 + $0x20] sm:$0xf]
    %v53 = vld [vmem:[#allocation2 + $0x24] sm:$0xf]
    %v54 = vld [vmem:[#allocation2 + $0x28] sm:$0xf]
    %v55 = vld [vmem:[#allocation2 + $0x2c] sm:$0xf]
    %v56 = vld [vmem:[#allocation2 + $0x30] sm:$0xf]
    %v57 = vld [vmem:[#allocation2 + $0x34] sm:$0xf]
    %v58 = vld [vmem:[#allocation2 + $0x38] sm:$0xf]
    %v59 = vld [vmem:[#allocation2 + $0x3c] sm:$0xf]
    %v60 = vld [vmem:[#allocation2 + $0x40] sm:$0xf]
    %v61 = vld [vmem:[#allocation2 + $0x44] sm:$0xf]
    %v62 = vld [vmem:[#allocation2 + $0x48] sm:$0xf]
    %v63 = vld [vmem:[#allocation2 + $0x4c] sm:$0xf]
    %v64 = vld [vmem:[#allocation2 + $0x50] sm:$0xf]
    %v65 = vld [vmem:[#allocation2 + $0x54] sm:$0xf]
    %v66 = vld [vmem:[#allocation2 + $0x58] sm:$0xf]
    %v67 = vld [vmem:[#allocation2 + $0x5c] sm:$0xf]
    %v68 = vld [vmem:[#allocation2 + $0x60] sm:$0xf]
    %v69 = vld [vmem:[#allocation2 + $0x64] sm:$0xf]
    %v70 = vld [vmem:[#allocation2 + $0x68] sm:$0xf]
    %v71 = vld [vmem:[#allocation2 + $0x6c] sm:$0xf]
    %v72 = vld [vmem:[#allocation2 + $0x70] sm:$0xf]
    %v73 = vld [vmem:[#allocation2 + $0x74] sm:$0xf]
    %v74 = vld [vmem:[#allocation2 + $0x78] sm:$0xf]
    %v75 = vld [vmem:[#allocation2 + $0x7c] sm:$0xf]
    %v76 = vld [vmem:[#allocation2 + $0x80] sm:$0xf]
    %v77 = vld [vmem:[#allocation2 + $0x84] sm:$0xf]
    %v78 = vld [vmem:[#allocation2 + $0x88] sm:$0xf]
    %v79 = vld [vmem:[#allocation2 + $0x8c] sm:$0xf]
    %v80 = vld [vmem:[#allocation2 + $0x90] sm:$0xf]
    %v81 = vld [vmem:[#allocation2 + $0x94] sm:$0xf]
    %v82 = vld [vmem:[#allocation2 + $0x98] sm:$0xf]
    %v83 = vld [vmem:[#allocation2 + $0x9c] sm:$0xf]
    %v84 = vld [vmem:[#allocation2 + $0xa0] sm:$0xf]
    %v85 = vld [vmem:[#allocation2 + $0xa4] sm:$0xf]
    %v86 = vld [vmem:[#allocation2 + $0xa8] sm:$0xf]
    %v87 = vld [vmem:[#allocation2 + $0xac] sm:$0xf]
    %v88 = vld [vmem:[#allocation2 + $0xb0] sm:$0xf]
    %v89 = vld [vmem:[#allocation2 + $0xb4] sm:$0xf]
    %v90 = vld [vmem:[#allocation2 + $0xb8] sm:$0xf]
    %v91 = vld [vmem:[#allocation2 + $0xbc] sm:$0xf]
    %v92 = vld [vmem:[#allocation2 + $0xc0] sm:$0xf]
    %v93 = vld [vmem:[#allocation2 + $0xc4] sm:$0xf]
    %v94 = vld [vmem:[#allocation2 + $0xc8] sm:$0xf]
    %v95 = vld [vmem:[#allocation2 + $0xcc] sm:$0xf]
    %v96 = vld [vmem:[#allocation2 + $0xd0] sm:$0xf]
    %v97 = vld [vmem:[#allocation2 + $0xd4] sm:$0xf]
    %v98 = vld [vmem:[#allocation2 + $0xd8] sm:$0xf]
    %v99 = vld [vmem:[#allocation2 + $0xdc] sm:$0xf]
    %v100 = vld [vmem:[#allocation2 + $0xe0] sm:$0xf]
    %v101 = vld [vmem:[#allocation2 + $0xe4] sm:$0xf]
    %v102 = vld [vmem:[#allocation2 + $0xe8] sm:$0xf]
    %v103 = vld [vmem:[#allocation2 + $0xec] sm:$0xf]
    %v104 = vld [vmem:[#allocation2 + $0xf0] sm:$0xf]
    %v105 = vld [vmem:[#allocation2 + $0xf4] sm:$0xf]
    %v106 = vld [vmem:[#allocation2 + $0xf8] sm:$0xf]
    %v107 = vld [vmem:[#allocation2 + $0xfc] sm:$0xf]
    %v108 = vld [vmem:[#allocation5] sm:$0xf]
    %v109 = vld [vmem:[#allocation5 + $0x4] sm:$0xf]
    %v110 = vld [vmem:[#allocation5 + $0x8] sm:$0xf]
    %v111 = vld [vmem:[#allocation5 + $0xc] sm:$0xf]
    %v112 = vld [vmem:[#allocation5 + $0x10] sm:$0xf]
    %v113 = vld [vmem:[#allocation5 + $0x14] sm:$0xf]
    %v114 = vld [vmem:[#allocation5 + $0x18] sm:$0xf]
    %v115 = vld [vmem:[#allocation5 + $0x1c] sm:$0xf]
    %v116 = vld [vmem:[#allocation5 + $0x20] sm:$0xf]
    %v117 = vld [vmem:[#allocation5 + $0x24] sm:$0xf]
    %v118 = vld [vmem:[#allocation5 + $0x28] sm:$0xf]
    %v119 = vld [vmem:[#allocation5 + $0x2c] sm:$0xf]
    %v120 = vld [vmem:[#allocation5 + $0x30] sm:$0xf]
    %v121 = vld [vmem:[#allocation5 + $0x34] sm:$0xf]
    %v122 = vld [vmem:[#allocation5 + $0x38] sm:$0xf]
    %v123 = vld [vmem:[#allocation5 + $0x3c] sm:$0xf]
    %v124 = vld [vmem:[%s2] sm:$0x1]
    %v126 = vlaneseq
    %v127 = vshrl.u32 %v126, 7
    %v128 = vsub.s32 0, %v127
    %v129 = vrot.slane %v124, %v128
    %v195 = vunpack.c.l.b16 %v44
    %v196 = vunpack.c.l.b16 %v45
    %v197 = vunpack.c.l.b16 %v46
    %v198 = vunpack.c.l.b16 %v47
    %v199 = vunpack.c.l.b16 %v48
    %v200 = vunpack.c.l.b16 %v49
    %v201 = vunpack.c.l.b16 %v50
    %v202 = vunpack.c.l.b16 %v51
    %v203 = vunpack.c.l.b16 %v52
    %v204 = vunpack.c.l.b16 %v53
    %v205 = vunpack.c.l.b16 %v54
    %v206 = vunpack.c.l.b16 %v55
    %v207 = vunpack.c.l.b16 %v56
    %v208 = vunpack.c.l.b16 %v57
    %v209 = vunpack.c.l.b16 %v58
    %v210 = vunpack.c.l.b16 %v59
    %v211 = vunpack.c.l.b16 %v60
    %v212 = vunpack.c.l.b16 %v61
    %v213 = vunpack.c.l.b16 %v62
    %v214 = vunpack.c.l.b16 %v63
    %v215 = vunpack.c.l.b16 %v64
    %v216 = vunpack.c.l.b16 %v65
    %v217 = vunpack.c.l.b16 %v66
    %v218 = vunpack.c.l.b16 %v67
    %v219 = vunpack.c.l.b16 %v68
    %v220 = vunpack.c.l.b16 %v69
    %v221 = vunpack.c.l.b16 %v70
    %v222 = vunpack.c.l.b16 %v71
    %v223 = vunpack.c.l.b16 %v72
    %v224 = vunpack.c.l.b16 %v73
    %v225 = vunpack.c.l.b16 %v74
    %v226 = vunpack.c.l.b16 %v75
    %v227 = vunpack.c.l.b16 %v76
    %v228 = vunpack.c.l.b16 %v77
    %v229 = vunpack.c.l.b16 %v78
    %v230 = vunpack.c.l.b16 %v79
    %v231 = vunpack.c.l.b16 %v80
    %v232 = vunpack.c.l.b16 %v81
    %v233 = vunpack.c.l.b16 %v82
    %v234 = vunpack.c.l.b16 %v83
    %v235 = vunpack.c.l.b16 %v84
    %v236 = vunpack.c.l.b16 %v85
    %v237 = vunpack.c.l.b16 %v86
    %v238 = vunpack.c.l.b16 %v87
    %v239 = vunpack.c.l.b16 %v88
    %v240 = vunpack.c.l.b16 %v89
    %v241 = vunpack.c.l.b16 %v90
    %v242 = vunpack.c.l.b16 %v91
    %v243 = vunpack.c.l.b16 %v92
    %v244 = vunpack.c.l.b16 %v93
    %v245 = vunpack.c.l.b16 %v94
    %v246 = vunpack.c.l.b16 %v95
    %v247 = vunpack.c.l.b16 %v96
    %v248 = vunpack.c.l.b16 %v97
    %v249 = vunpack.c.l.b16 %v98
    %v250 = vunpack.c.l.b16 %v99
    %v251 = vunpack.c.l.b16 %v100
    %v252 = vunpack.c.l.b16 %v101
    %v253 = vunpack.c.l.b16 %v102
    %v254 = vunpack.c.l.b16 %v103
    %v255 = vunpack.c.l.b16 %v104
    %v256 = vunpack.c.l.b16 %v105
    %v257 = vunpack.c.l.b16 %v106
    %v258 = vunpack.c.l.b16 %v107
    %v259 = vpack.c.b16 %v196, %v195
    %v260 = vpack.c.b16 %v198, %v197
    %v261 = vpack.c.b16 %v200, %v199
    %v262 = vpack.c.b16 %v202, %v201
    %v263 = vpack.c.b16 %v204, %v203
    %v264 = vpack.c.b16 %v206, %v205
    %v265 = vpack.c.b16 %v208, %v207
    %v266 = vpack.c.b16 %v210, %v209
    %v267 = vpack.c.b16 %v212, %v211
    %v268 = vpack.c.b16 %v214, %v213
    %v269 = vpack.c.b16 %v216, %v215
    %v270 = vpack.c.b16 %v218, %v217
    %v271 = vpack.c.b16 %v220, %v219
    %v272 = vpack.c.b16 %v222, %v221
    %v273 = vpack.c.b16 %v224, %v223
    %v274 = vpack.c.b16 %v226, %v225
    %v275 = vpack.c.b16 %v228, %v227
    %v276 = vpack.c.b16 %v230, %v229
    %v277 = vpack.c.b16 %v232, %v231
    %v278 = vpack.c.b16 %v234, %v233
    %v279 = vpack.c.b16 %v236, %v235
    %v280 = vpack.c.b16 %v238, %v237
    %v281 = vpack.c.b16 %v240, %v239
    %v282 = vpack.c.b16 %v242, %v241
    %v283 = vpack.c.b16 %v244, %v243
    %v284 = vpack.c.b16 %v246, %v245
    %v285 = vpack.c.b16 %v248, %v247
    %v286 = vpack.c.b16 %v250, %v249
    %v287 = vpack.c.b16 %v252, %v251
    %v288 = vpack.c.b16 %v254, %v253
    %v289 = vpack.c.b16 %v256, %v255
    %v290 = vpack.c.b16 %v258, %v257
    %v339 = vunpack.c.l.b16 %v108
    %v340 = vunpack.c.l.b16 %v109
    %v341 = vunpack.c.l.b16 %v110
    %v342 = vunpack.c.l.b16 %v111
    %v343 = vunpack.c.l.b16 %v112
    %v344 = vunpack.c.l.b16 %v113
    %v345 = vunpack.c.l.b16 %v114
    %v346 = vunpack.c.l.b16 %v115
    %v347 = vunpack.c.l.b16 %v116
    %v348 = vunpack.c.l.b16 %v117
    %v349 = vunpack.c.l.b16 %v118
    %v350 = vunpack.c.l.b16 %v119
    %v351 = vunpack.c.l.b16 %v120
    %v352 = vunpack.c.l.b16 %v121
    %v353 = vunpack.c.l.b16 %v122
    %v354 = vunpack.c.l.b16 %v123
    %v355 = vpack.c.b16 %v340, %v339
    %v356 = vpack.c.b16 %v342, %v341
    %v357 = vpack.c.b16 %v344, %v343
    %v358 = vpack.c.b16 %v346, %v345
    %v359 = vpack.c.b16 %v348, %v347
    %v360 = vpack.c.b16 %v350, %v349
    %v361 = vpack.c.b16 %v352, %v351
    %v362 = vpack.c.b16 %v354, %v353
    %371 = vmatprep.subr.bf16.mxu0 0
    %372 = vmatpush1.bf16.msra.mxu0 %v355
    %373 = vmatprep.subr.bf16.mxu0 0
    %374 = vmatpush1.bf16.msra.mxu0 %v356
    %375 = vmatprep.subr.bf16.mxu0 0
    %376 = vmatpush1.bf16.msra.mxu0 %v357
    %377 = vmatprep.subr.bf16.mxu0 0
    %378 = vmatpush1.bf16.msra.mxu0 %v358
    %379 = vmatprep.subr.bf16.mxu0 0
    %380 = vmatpush1.bf16.msra.mxu0 %v359
    %381 = vmatprep.subr.bf16.mxu0 0
    %382 = vmatpush1.bf16.msra.mxu0 %v360
    %383 = vmatprep.subr.bf16.mxu0 0
    %384 = vmatpush1.bf16.msra.mxu0 %v361
    %385 = vmatprep.subr.bf16.mxu0 0
    %386 = vmatpush1.bf16.msra.mxu0 %v362
    %387 = vmatprep.subr.bf16.mxu0 0
    %388 = vmatpush1.bf16.msra.mxu0 0
    %389 = vmatprep.subr.bf16.mxu0 0
    %390 = vmatpush1.bf16.msra.mxu0 0
    %391 = vmatprep.subr.bf16.mxu0 0
    %392 = vmatpush1.bf16.msra.mxu0 0
    %393 = vmatprep.subr.bf16.mxu0 0
    %394 = vmatpush1.bf16.msra.mxu0 0
    %395 = vmatprep.subr.bf16.mxu0 0
    %396 = vmatpush1.bf16.msra.mxu0 0
    %397 = vmatprep.subr.bf16.mxu0 0
    %398 = vmatpush1.bf16.msra.mxu0 0
    %399 = vmatprep.subr.bf16.mxu0 0
    %400 = vmatpush1.bf16.msra.mxu0 0
    %401 = vmatprep.subr.bf16.mxu0 0
    %402 = vmatpush1.bf16.msra.mxu0 0
    %403 = vmatprep.mubr.bf16.mxu0 0
    %404 = vmatmul.mubr.bf16.gmra.mrb[0].mxu0 %v259
    %v405 = vpop.f32.mrb[0].mxu0
    %v406 = vadd.f32 %v129, %v405
    %v407 = vpop.f32.mrb[0].mxu0
    %v408 = vpop.f32.mrb[0].mxu0
    %v409 = vadd.f32 %v129, %v408
    %v410 = vpop.f32.mrb[0].mxu0
    %411 = vmatprep.mubr.bf16.mxu0 0
    %412 = vmatmul.mubr.bf16.gmra.mrb[0].mxu0 %v260
    %v413 = vpop.f32.mrb[0].mxu0
    %v414 = vadd.f32 %v129, %v413
    %v415 = vpop.f32.mrb[0].mxu0
    %v416 = vpop.f32.mrb[0].mxu0
    %v417 = vadd.f32 %v129, %v416
    %v418 = vpop.f32.mrb[0].mxu0
    %419 = vmatprep.mubr.bf16.mxu0 0
    %420 = vmatmul.mubr.bf16.gmra.mrb[0].mxu0 %v261
    %v421 = vpop.f32.mrb[0].mxu0
    %v422 = vadd.f32 %v129, %v421
    %v423 = vpop.f32.mrb[0].mxu0
    %v424 = vpop.f32.mrb[0].mxu0
    %v425 = vadd.f32 %v129, %v424
    %v426 = vpop.f32.mrb[0].mxu0
    %427 = vmatprep.mubr.bf16.mxu0 0
    %428 = vmatmul.mubr.bf16.gmra.mrb[0].mxu0 %v262
    %v429 = vpop.f32.mrb[0].mxu0
    %v430 = vadd.f32 %v129, %v429
    %v431 = vpop.f32.mrb[0].mxu0
    %v432 = vpop.f32.mrb[0].mxu0
    %v433 = vadd.f32 %v129, %v432
    %v434 = vpop.f32.mrb[0].mxu0
    %435 = vmatprep.mubr.bf16.mxu0 0
    %436 = vmatmul.mubr.bf16.gmra.mrb[0].mxu0 %v263
    %v437 = vpop.f32.mrb[0].mxu0
    %v438 = vadd.f32 %v129, %v437
    %v439 = vpop.f32.mrb[0].mxu0
    %v440 = vpop.f32.mrb[0].mxu0
    %v441 = vadd.f32 %v129, %v440
    %v442 = vpop.f32.mrb[0].mxu0
    %443 = vmatprep.mubr.bf16.mxu0 0
    %444 = vmatmul.mubr.bf16.gmra.mrb[0].mxu0 %v264
    %v445 = vpop.f32.mrb[0].mxu0
    %v446 = vadd.f32 %v129, %v445
    %v447 = vpop.f32.mrb[0].mxu0
    %v448 = vpop.f32.mrb[0].mxu0
    %v449 = vadd.f32 %v129, %v448
    %v450 = vpop.f32.mrb[0].mxu0
    %451 = vmatprep.mubr.bf16.mxu0 0
    %452 = vmatmul.mubr.bf16.gmra.mrb[0].mxu0 %v265
    %v453 = vpop.f32.mrb[0].mxu0
    %v454 = vadd.f32 %v129, %v453
    %v455 = vpop.f32.mrb[0].mxu0
    %v456 = vpop.f32.mrb[0].mxu0
    %v457 = vadd.f32 %v129, %v456
    %v458 = vpop.f32.mrb[0].mxu0
    %459 = vmatprep.mubr.bf16.mxu0 0
    %460 = vmatmul.mubr.bf16.gmra.mrb[0].mxu0 %v266
    %v461 = vpop.f32.mrb[0].mxu0
    %v462 = vadd.f32 %v129, %v461
    %v463 = vpop.f32.mrb[0].mxu0
    %v464 = vpop.f32.mrb[0].mxu0
    %v465 = vadd.f32 %v129, %v464
    %v466 = vpop.f32.mrb[0].mxu0
    %467 = vmatprep.mubr.bf16.mxu0 0
    %468 = vmatmul.mubr.bf16.gmra.mrb[0].mxu0 %v267
    %v469 = vpop.f32.mrb[0].mxu0
    %v470 = vadd.f32 %v129, %v469
    %v471 = vpop.f32.mrb[0].mxu0
    %v472 = vpop.f32.mrb[0].mxu0
    %v473 = vadd.f32 %v129, %v472
    %v474 = vpop.f32.mrb[0].mxu0
    %475 = vmatprep.mubr.bf16.mxu0 0
    %476 = vmatmul.mubr.bf16.gmra.mrb[0].mxu0 %v268
    %v477 = vpop.f32.mrb[0].mxu0
    %v478 = vadd.f32 %v129, %v477
    %v479 = vpop.f32.mrb[0].mxu0
    %v480 = vpop.f32.mrb[0].mxu0
    %v481 = vadd.f32 %v129, %v480
    %v482 = vpop.f32.mrb[0].mxu0
    %483 = vmatprep.mubr.bf16.mxu0 0
    %484 = vmatmul.mubr.bf16.gmra.mrb[0].mxu0 %v269
    %v485 = vpop.f32.mrb[0].mxu0
    %v486 = vadd.f32 %v129, %v485
    %v487 = vpop.f32.mrb[0].mxu0
    %v488 = vpop.f32.mrb[0].mxu0
    %v489 = vadd.f32 %v129, %v488
    %v490 = vpop.f32.mrb[0].mxu0
    %491 = vmatprep.mubr.bf16.mxu0 0
    %492 = vmatmul.mubr.bf16.gmra.mrb[0].mxu0 %v270
    %v493 = vpop.f32.mrb[0].mxu0
    %v494 = vadd.f32 %v129, %v493
    %v495 = vpop.f32.mrb[0].mxu0
    %v496 = vpop.f32.mrb[0].mxu0
    %v497 = vadd.f32 %v129, %v496
    %v498 = vpop.f32.mrb[0].mxu0
    %499 = vmatprep.mubr.bf16.mxu0 0
    %500 = vmatmul.mubr.bf16.gmra.mrb[0].mxu0 %v271
    %v501 = vpop.f32.mrb[0].mxu0
    %v502 = vadd.f32 %v129, %v501
    %v503 = vpop.f32.mrb[0].mxu0
    %v504 = vpop.f32.mrb[0].mxu0
    %v505 = vadd.f32 %v129, %v504
    %v506 = vpop.f32.mrb[0].mxu0
    %507 = vmatprep.mubr.bf16.mxu0 0
    %508 = vmatmul.mubr.bf16.gmra.mrb[0].mxu0 %v272
    %v509 = vpop.f32.mrb[0].mxu0
    %v510 = vadd.f32 %v129, %v509
    %v511 = vpop.f32.mrb[0].mxu0
    %v512 = vpop.f32.mrb[0].mxu0
    %v513 = vadd.f32 %v129, %v512
    %v514 = vpop.f32.mrb[0].mxu0
    %515 = vmatprep.mubr.bf16.mxu0 0
    %516 = vmatmul.mubr.bf16.gmra.mrb[0].mxu0 %v273
    %v517 = vpop.f32.mrb[0].mxu0
    %v518 = vadd.f32 %v129, %v517
    %v519 = vpop.f32.mrb[0].mxu0
    %v520 = vpop.f32.mrb[0].mxu0
    %v521 = vadd.f32 %v129, %v520
    %v522 = vpop.f32.mrb[0].mxu0
    %523 = vmatprep.mubr.bf16.mxu0 0
    %524 = vmatmul.mubr.bf16.gmra.mrb[0].mxu0 %v274
    %v525 = vpop.f32.mrb[0].mxu0
    %v526 = vadd.f32 %v129, %v525
    %v527 = vpop.f32.mrb[0].mxu0
    %v528 = vpop.f32.mrb[0].mxu0
    %v529 = vadd.f32 %v129, %v528
    %v530 = vpop.f32.mrb[0].mxu0
    %531 = vmatprep.mubr.bf16.mxu0 0
    %532 = vmatmul.mubr.bf16.gmra.mrb[0].mxu0 %v275
    %v533 = vpop.f32.mrb[0].mxu0
    %v534 = vadd.f32 %v129, %v533
    %v535 = vpop.f32.mrb[0].mxu0
    %v536 = vpop.f32.mrb[0].mxu0
    %v537 = vadd.f32 %v129, %v536
    %v538 = vpop.f32.mrb[0].mxu0
    %539 = vmatprep.mubr.bf16.mxu0 0
    %540 = vmatmul.mubr.bf16.gmra.mrb[0].mxu0 %v276
    %v541 = vpop.f32.mrb[0].mxu0
    %v542 = vadd.f32 %v129, %v541
    %v543 = vpop.f32.mrb[0].mxu0
    %v544 = vpop.f32.mrb[0].mxu0
    %v545 = vadd.f32 %v129, %v544
    %v546 = vpop.f32.mrb[0].mxu0
    %547 = vmatprep.mubr.bf16.mxu0 0
    %548 = vmatmul.mubr.bf16.gmra.mrb[0].mxu0 %v277
    %v549 = vpop.f32.mrb[0].mxu0
    %v550 = vadd.f32 %v129, %v549
    %v551 = vpop.f32.mrb[0].mxu0
    %v552 = vpop.f32.mrb[0].mxu0
    %v553 = vadd.f32 %v129, %v552
    %v554 = vpop.f32.mrb[0].mxu0
    %555 = vmatprep.mubr.bf16.mxu0 0
    %556 = vmatmul.mubr.bf16.gmra.mrb[0].mxu0 %v278
    %v557 = vpop.f32.mrb[0].mxu0
    %v558 = vadd.f32 %v129, %v557
    %v559 = vpop.f32.mrb[0].mxu0
    %v560 = vpop.f32.mrb[0].mxu0
    %v561 = vadd.f32 %v129, %v560
    %v562 = vpop.f32.mrb[0].mxu0
    %563 = vmatprep.mubr.bf16.mxu0 0
    %564 = vmatmul.mubr.bf16.gmra.mrb[0].mxu0 %v279
    %v565 = vpop.f32.mrb[0].mxu0
    %v566 = vadd.f32 %v129, %v565
    %v567 = vpop.f32.mrb[0].mxu0
    %v568 = vpop.f32.mrb[0].mxu0
    %v569 = vadd.f32 %v129, %v568
    %v570 = vpop.f32.mrb[0].mxu0
    %571 = vmatprep.mubr.bf16.mxu0 0
    %572 = vmatmul.mubr.bf16.gmra.mrb[0].mxu0 %v280
    %v573 = vpop.f32.mrb[0].mxu0
    %v574 = vadd.f32 %v129, %v573
    %v575 = vpop.f32.mrb[0].mxu0
    %v576 = vpop.f32.mrb[0].mxu0
    %v577 = vadd.f32 %v129, %v576
    %v578 = vpop.f32.mrb[0].mxu0
    %579 = vmatprep.mubr.bf16.mxu0 0
    %580 = vmatmul.mubr.bf16.gmra.mrb[0].mxu0 %v281
    %v581 = vpop.f32.mrb[0].mxu0
    %v582 = vadd.f32 %v129, %v581
    %v583 = vpop.f32.mrb[0].mxu0
    %v584 = vpop.f32.mrb[0].mxu0
    %v585 = vadd.f32 %v129, %v584
    %v586 = vpop.f32.mrb[0].mxu0
    %587 = vmatprep.mubr.bf16.mxu0 0
    %588 = vmatmul.mubr.bf16.gmra.mrb[0].mxu0 %v282
    %v589 = vpop.f32.mrb[0].mxu0
    %v590 = vadd.f32 %v129, %v589
    %v591 = vpop.f32.mrb[0].mxu0
    %v592 = vpop.f32.mrb[0].mxu0
    %v593 = vadd.f32 %v129, %v592
    %v594 = vpop.f32.mrb[0].mxu0
    %595 = vmatprep.mubr.bf16.mxu0 0
    %596 = vmatmul.mubr.bf16.gmra.mrb[0].mxu0 %v283
    %v597 = vpop.f32.mrb[0].mxu0
    %v598 = vadd.f32 %v129, %v597
    %v599 = vpop.f32.mrb[0].mxu0
    %v600 = vpop.f32.mrb[0].mxu0
    %v601 = vadd.f32 %v129, %v600
    %v602 = vpop.f32.mrb[0].mxu0
    %603 = vmatprep.mubr.bf16.mxu0 0
    %604 = vmatmul.mubr.bf16.gmra.mrb[0].mxu0 %v284
    %v605 = vpop.f32.mrb[0].mxu0
    %v606 = vadd.f32 %v129, %v605
    %v607 = vpop.f32.mrb[0].mxu0
    %v608 = vpop.f32.mrb[0].mxu0
    %v609 = vadd.f32 %v129, %v608
    %v610 = vpop.f32.mrb[0].mxu0
    %611 = vmatprep.mubr.bf16.mxu0 0
    %612 = vmatmul.mubr.bf16.gmra.mrb[0].mxu0 %v285
    %v613 = vpop.f32.mrb[0].mxu0
    %v614 = vadd.f32 %v129, %v613
    %v615 = vpop.f32.mrb[0].mxu0
    %v616 = vpop.f32.mrb[0].mxu0
    %v617 = vadd.f32 %v129, %v616
    %v618 = vpop.f32.mrb[0].mxu0
    %619 = vmatprep.mubr.bf16.mxu0 0
    %620 = vmatmul.mubr.bf16.gmra.mrb[0].mxu0 %v286
    %v621 = vpop.f32.mrb[0].mxu0
    %v622 = vadd.f32 %v129, %v621
    %v623 = vpop.f32.mrb[0].mxu0
    %v624 = vpop.f32.mrb[0].mxu0
    %v625 = vadd.f32 %v129, %v624
    %v626 = vpop.f32.mrb[0].mxu0
    %627 = vmatprep.mubr.bf16.mxu0 0
    %628 = vmatmul.mubr.bf16.gmra.mrb[0].mxu0 %v287
    %v629 = vpop.f32.mrb[0].mxu0
    %v630 = vadd.f32 %v129, %v629
    %v631 = vpop.f32.mrb[0].mxu0
    %v632 = vpop.f32.mrb[0].mxu0
    %v633 = vadd.f32 %v129, %v632
    %v634 = vpop.f32.mrb[0].mxu0
    %635 = vmatprep.mubr.bf16.mxu0 0
    %636 = vmatmul.mubr.bf16.gmra.mrb[0].mxu0 %v288
    %v637 = vpop.f32.mrb[0].mxu0
    %v638 = vadd.f32 %v129, %v637
    %v639 = vpop.f32.mrb[0].mxu0
    %v640 = vpop.f32.mrb[0].mxu0
    %v641 = vadd.f32 %v129, %v640
    %v642 = vpop.f32.mrb[0].mxu0
    %643 = vmatprep.mubr.bf16.mxu0 0
    %644 = vmatmul.mubr.bf16.gmra.mrb[0].mxu0 %v289
    %v645 = vpop.f32.mrb[0].mxu0
    %v646 = vadd.f32 %v129, %v645
    %v647 = vpop.f32.mrb[0].mxu0
    %v648 = vpop.f32.mrb[0].mxu0
    %v649 = vadd.f32 %v129, %v648
    %v650 = vpop.f32.mrb[0].mxu0
    %651 = vmatprep.mubr.bf16.mxu0 0
    %652 = vmatmul.mubr.bf16.gmra.mrb[0].mxu0 %v290
    %v653 = vpop.f32.mrb[0].mxu0
    %v654 = vadd.f32 %v129, %v653
    %v655 = vpop.f32.mrb[0].mxu0
    %v656 = vpop.f32.mrb[0].mxu0
    %v657 = vadd.f32 %v129, %v656
    %v658 = vpop.f32.mrb[0].mxu0
    %659 = vdwg.mxu0
    %v660 = vmax.f32 %v406, 0.0
    %v661 = vmax.f32 %v409, 0.0
    %v662 = vmax.f32 %v414, 0.0
    %v663 = vmax.f32 %v417, 0.0
    %v664 = vmax.f32 %v422, 0.0
    %v665 = vmax.f32 %v425, 0.0
    %v666 = vmax.f32 %v430, 0.0
    %v667 = vmax.f32 %v433, 0.0
    %v668 = vmax.f32 %v438, 0.0
    %v669 = vmax.f32 %v441, 0.0
    %v670 = vmax.f32 %v446, 0.0
    %v671 = vmax.f32 %v449, 0.0
    %v672 = vmax.f32 %v454, 0.0
    %v673 = vmax.f32 %v457, 0.0
    %v674 = vmax.f32 %v462, 0.0
    %v675 = vmax.f32 %v465, 0.0
    %v676 = vmax.f32 %v470, 0.0
    %v677 = vmax.f32 %v473, 0.0
    %v678 = vmax.f32 %v478, 0.0
    %v679 = vmax.f32 %v481, 0.0
    %v680 = vmax.f32 %v486, 0.0
    %v681 = vmax.f32 %v489, 0.0
    %v682 = vmax.f32 %v494, 0.0
    %v683 = vmax.f32 %v497, 0.0
    %v684 = vmax.f32 %v502, 0.0
    %v685 = vmax.f32 %v505, 0.0
    %v686 = vmax.f32 %v510, 0.0
    %v687 = vmax.f32 %v513, 0.0
    %v688 = vmax.f32 %v518, 0.0
    %v689 = vmax.f32 %v521, 0.0
    %v690 = vmax.f32 %v526, 0.0
    %v691 = vmax.f32 %v529, 0.0
    %v692 = vmax.f32 %v534, 0.0
    %v693 = vmax.f32 %v537, 0.0
    %v694 = vmax.f32 %v542, 0.0
    %v695 = vmax.f32 %v545, 0.0
    %v696 = vmax.f32 %v550, 0.0
    %v697 = vmax.f32 %v553, 0.0
    %v698 = vmax.f32 %v558, 0.0
    %v699 = vmax.f32 %v561, 0.0
    %v700 = vmax.f32 %v566, 0.0
    %v701 = vmax.f32 %v569, 0.0
    %v702 = vmax.f32 %v574, 0.0
    %v703 = vmax.f32 %v577, 0.0
    %v704 = vmax.f32 %v582, 0.0
    %v705 = vmax.f32 %v585, 0.0
    %v706 = vmax.f32 %v590, 0.0
    %v707 = vmax.f32 %v593, 0.0
    %v708 = vmax.f32 %v598, 0.0
    %v709 = vmax.f32 %v601, 0.0
    %v710 = vmax.f32 %v606, 0.0
    %v711 = vmax.f32 %v609, 0.0
    %v712 = vmax.f32 %v614, 0.0
    %v713 = vmax.f32 %v617, 0.0
    %v714 = vmax.f32 %v622, 0.0
    %v715 = vmax.f32 %v625, 0.0
    %v716 = vmax.f32 %v630, 0.0
    %v717 = vmax.f32 %v633, 0.0
    %v718 = vmax.f32 %v638, 0.0
    %v719 = vmax.f32 %v641, 0.0
    %v720 = vmax.f32 %v646, 0.0
    %v721 = vmax.f32 %v649, 0.0
    %v722 = vmax.f32 %v654, 0.0
    %v723 = vmax.f32 %v657, 0.0
    %v724 = vpack.c.bf16 %v661, %v660
    %v725 = vpack.c.bf16 %v663, %v662
    %v726 = vpack.c.bf16 %v665, %v664
    %v727 = vpack.c.bf16 %v667, %v666
    %v728 = vpack.c.bf16 %v669, %v668
    %v729 = vpack.c.bf16 %v671, %v670
    %v730 = vpack.c.bf16 %v673, %v672
    %v731 = vpack.c.bf16 %v675, %v674
    %v732 = vpack.c.bf16 %v677, %v676
    %v733 = vpack.c.bf16 %v679, %v678
    %v734 = vpack.c.bf16 %v681, %v680
    %v735 = vpack.c.bf16 %v683, %v682
    %v736 = vpack.c.bf16 %v685, %v684
    %v737 = vpack.c.bf16 %v687, %v686
    %v738 = vpack.c.bf16 %v689, %v688
    %v739 = vpack.c.bf16 %v691, %v690
    %v740 = vpack.c.bf16 %v693, %v692
    %v741 = vpack.c.bf16 %v695, %v694
    %v742 = vpack.c.bf16 %v697, %v696
    %v743 = vpack.c.bf16 %v699, %v698
    %v744 = vpack.c.bf16 %v701, %v700
    %v745 = vpack.c.bf16 %v703, %v702
    %v746 = vpack.c.bf16 %v705, %v704
    %v747 = vpack.c.bf16 %v707, %v706
    %v748 = vpack.c.bf16 %v709, %v708
    %v749 = vpack.c.bf16 %v711, %v710
    %v750 = vpack.c.bf16 %v713, %v712
    %v751 = vpack.c.bf16 %v715, %v714
    %v752 = vpack.c.bf16 %v717, %v716
    %v753 = vpack.c.bf16 %v719, %v718
    %v754 = vpack.c.bf16 %v721, %v720
    %v755 = vpack.c.bf16 %v723, %v722
    %v788 = vunpack.c.l.b16 %v724
    %v789 = vunpack.c.h.b16 %v724
    %v790 = vunpack.c.l.b16 %v725
    %v791 = vunpack.c.h.b16 %v725
    %v792 = vunpack.c.l.b16 %v726
    %v793 = vunpack.c.h.b16 %v726
    %v794 = vunpack.c.l.b16 %v727
    %v795 = vunpack.c.h.b16 %v727
    %v796 = vunpack.c.l.b16 %v728
    %v797 = vunpack.c.h.b16 %v728
    %v798 = vunpack.c.l.b16 %v729
    %v799 = vunpack.c.h.b16 %v729
    %v800 = vunpack.c.l.b16 %v730
    %v801 = vunpack.c.h.b16 %v730
    %v802 = vunpack.c.l.b16 %v731
    %v803 = vunpack.c.h.b16 %v731
    %v804 = vunpack.c.l.b16 %v732
    %v805 = vunpack.c.h.b16 %v732
    %v806 = vunpack.c.l.b16 %v733
    %v807 = vunpack.c.h.b16 %v733
    %v808 = vunpack.c.l.b16 %v734
    %v809 = vunpack.c.h.b16 %v734
    %v810 = vunpack.c.l.b16 %v735
    %v811 = vunpack.c.h.b16 %v735
    %v812 = vunpack.c.l.b16 %v736
    %v813 = vunpack.c.h.b16 %v736
    %v814 = vunpack.c.l.b16 %v737
    %v815 = vunpack.c.h.b16 %v737
    %v816 = vunpack.c.l.b16 %v738
    %v817 = vunpack.c.h.b16 %v738
    %v818 = vunpack.c.l.b16 %v739
    %v819 = vunpack.c.h.b16 %v739
    %v820 = vunpack.c.l.b16 %v740
    %v821 = vunpack.c.h.b16 %v740
    %v822 = vunpack.c.l.b16 %v741
    %v823 = vunpack.c.h.b16 %v741
    %v824 = vunpack.c.l.b16 %v742
    %v825 = vunpack.c.h.b16 %v742
    %v826 = vunpack.c.l.b16 %v743
    %v827 = vunpack.c.h.b16 %v743
    %v828 = vunpack.c.l.b16 %v744
    %v829 = vunpack.c.h.b16 %v744
    %v830 = vunpack.c.l.b16 %v745
    %v831 = vunpack.c.h.b16 %v745
    %v832 = vunpack.c.l.b16 %v746
    %v833 = vunpack.c.h.b16 %v746
    %v834 = vunpack.c.l.b16 %v747
    %v835 = vunpack.c.h.b16 %v747
    %v836 = vunpack.c.l.b16 %v748
    %v837 = vunpack.c.h.b16 %v748
    %v838 = vunpack.c.l.b16 %v749
    %v839 = vunpack.c.h.b16 %v749
    %v840 = vunpack.c.l.b16 %v750
    %v841 = vunpack.c.h.b16 %v750
    %v842 = vunpack.c.l.b16 %v751
    %v843 = vunpack.c.h.b16 %v751
    %v844 = vunpack.c.l.b16 %v752
    %v845 = vunpack.c.h.b16 %v752
    %v846 = vunpack.c.l.b16 %v753
    %v847 = vunpack.c.h.b16 %v753
    %v848 = vunpack.c.l.b16 %v754
    %v849 = vunpack.c.h.b16 %v754
    %v850 = vunpack.c.l.b16 %v755
    %v851 = vunpack.c.h.b16 %v755
    %v852 = vpack.c.b16 %v788, %v788
    %v853 = vpack.c.b16 %v789, %v789
    %v854 = vpack.c.b16 %v790, %v790
    %v855 = vpack.c.b16 %v791, %v791
    %v856 = vpack.c.b16 %v792, %v792
    %v857 = vpack.c.b16 %v793, %v793
    %v858 = vpack.c.b16 %v794, %v794
    %v859 = vpack.c.b16 %v795, %v795
    %v860 = vpack.c.b16 %v796, %v796
    %v861 = vpack.c.b16 %v797, %v797
    %v862 = vpack.c.b16 %v798, %v798
    %v863 = vpack.c.b16 %v799, %v799
    %v864 = vpack.c.b16 %v800, %v800
    %v865 = vpack.c.b16 %v801, %v801
    %v866 = vpack.c.b16 %v802, %v802
    %v867 = vpack.c.b16 %v803, %v803
    %v868 = vpack.c.b16 %v804, %v804
    %v869 = vpack.c.b16 %v805, %v805
    %v870 = vpack.c.b16 %v806, %v806
    %v871 = vpack.c.b16 %v807, %v807
    %v872 = vpack.c.b16 %v808, %v808
    %v873 = vpack.c.b16 %v809, %v809
    %v874 = vpack.c.b16 %v810, %v810
    %v875 = vpack.c.b16 %v811, %v811
    %v876 = vpack.c.b16 %v812, %v812
    %v877 = vpack.c.b16 %v813, %v813
    %v878 = vpack.c.b16 %v814, %v814
    %v879 = vpack.c.b16 %v815, %v815
    %v880 = vpack.c.b16 %v816, %v816
    %v881 = vpack.c.b16 %v817, %v817
    %v882 = vpack.c.b16 %v818, %v818
    %v883 = vpack.c.b16 %v819, %v819
    %v884 = vpack.c.b16 %v820, %v820
    %v885 = vpack.c.b16 %v821, %v821
    %v886 = vpack.c.b16 %v822, %v822
    %v887 = vpack.c.b16 %v823, %v823
    %v888 = vpack.c.b16 %v824, %v824
    %v889 = vpack.c.b16 %v825, %v825
    %v890 = vpack.c.b16 %v826, %v826
    %v891 = vpack.c.b16 %v827, %v827
    %v892 = vpack.c.b16 %v828, %v828
    %v893 = vpack.c.b16 %v829, %v829
    %v894 = vpack.c.b16 %v830, %v830
    %v895 = vpack.c.b16 %v831, %v831
    %v896 = vpack.c.b16 %v832, %v832
    %v897 = vpack.c.b16 %v833, %v833
    %v898 = vpack.c.b16 %v834, %v834
    %v899 = vpack.c.b16 %v835, %v835
    %v900 = vpack.c.b16 %v836, %v836
    %v901 = vpack.c.b16 %v837, %v837
    %v902 = vpack.c.b16 %v838, %v838
    %v903 = vpack.c.b16 %v839, %v839
    %v904 = vpack.c.b16 %v840, %v840
    %v905 = vpack.c.b16 %v841, %v841
    %v906 = vpack.c.b16 %v842, %v842
    %v907 = vpack.c.b16 %v843, %v843
    %v908 = vpack.c.b16 %v844, %v844
    %v909 = vpack.c.b16 %v845, %v845
    %v910 = vpack.c.b16 %v846, %v846
    %v911 = vpack.c.b16 %v847, %v847
    %v912 = vpack.c.b16 %v848, %v848
    %v913 = vpack.c.b16 %v849, %v849
    %v914 = vpack.c.b16 %v850, %v850
    %v915 = vpack.c.b16 %v851, %v851
    %980 = vst [vmem:[#allocation7] sm:$0xf] %v852
    %981 = vst [vmem:[#allocation7 + $0x4] sm:$0xf] %v853
    %982 = vst [vmem:[#allocation7 + $0x8] sm:$0xf] %v854
    %983 = vst [vmem:[#allocation7 + $0xc] sm:$0xf] %v855
    %984 = vst [vmem:[#allocation7 + $0x10] sm:$0xf] %v856
    %985 = vst [vmem:[#allocation7 + $0x14] sm:$0xf] %v857
    %986 = vst [vmem:[#allocation7 + $0x18] sm:$0xf] %v858
    %987 = vst [vmem:[#allocation7 + $0x1c] sm:$0xf] %v859
    %988 = vst [vmem:[#allocation7 + $0x20] sm:$0xf] %v860
    %989 = vst [vmem:[#allocation7 + $0x24] sm:$0xf] %v861
    %990 = vst [vmem:[#allocation7 + $0x28] sm:$0xf] %v862
    %991 = vst [vmem:[#allocation7 + $0x2c] sm:$0xf] %v863
    %992 = vst [vmem:[#allocation7 + $0x30] sm:$0xf] %v864
    %993 = vst [vmem:[#allocation7 + $0x34] sm:$0xf] %v865
    %994 = vst [vmem:[#allocation7 + $0x38] sm:$0xf] %v866
    %995 = vst [vmem:[#allocation7 + $0x3c] sm:$0xf] %v867
    %996 = vst [vmem:[#allocation7 + $0x40] sm:$0xf] %v868
    %997 = vst [vmem:[#allocation7 + $0x44] sm:$0xf] %v869
    %998 = vst [vmem:[#allocation7 + $0x48] sm:$0xf] %v870
    %999 = vst [vmem:[#allocation7 + $0x4c] sm:$0xf] %v871
    %1000 = vst [vmem:[#allocation7 + $0x50] sm:$0xf] %v872
    %1001 = vst [vmem:[#allocation7 + $0x54] sm:$0xf] %v873
    %1002 = vst [vmem:[#allocation7 + $0x58] sm:$0xf] %v874
    %1003 = vst [vmem:[#allocation7 + $0x5c] sm:$0xf] %v875
    %1004 = vst [vmem:[#allocation7 + $0x60] sm:$0xf] %v876
    %1005 = vst [vmem:[#allocation7 + $0x64] sm:$0xf] %v877
    %1006 = vst [vmem:[#allocation7 + $0x68] sm:$0xf] %v878
    %1007 = vst [vmem:[#allocation7 + $0x6c] sm:$0xf] %v879
    %1008 = vst [vmem:[#allocation7 + $0x70] sm:$0xf] %v880
    %1009 = vst [vmem:[#allocation7 + $0x74] sm:$0xf] %v881
    %1010 = vst [vmem:[#allocation7 + $0x78] sm:$0xf] %v882
    %1011 = vst [vmem:[#allocation7 + $0x7c] sm:$0xf] %v883
    %1012 = vst [vmem:[#allocation7 + $0x80] sm:$0xf] %v884
    %1013 = vst [vmem:[#allocation7 + $0x84] sm:$0xf] %v885
    %1014 = vst [vmem:[#allocation7 + $0x88] sm:$0xf] %v886
    %1015 = vst [vmem:[#allocation7 + $0x8c] sm:$0xf] %v887
    %1016 = vst [vmem:[#allocation7 + $0x90] sm:$0xf] %v888
    %1017 = vst [vmem:[#allocation7 + $0x94] sm:$0xf] %v889
    %1018 = vst [vmem:[#allocation7 + $0x98] sm:$0xf] %v890
    %1019 = vst [vmem:[#allocation7 + $0x9c] sm:$0xf] %v891
    %1020 = vst [vmem:[#allocation7 + $0xa0] sm:$0xf] %v892
    %1021 = vst [vmem:[#allocation7 + $0xa4] sm:$0xf] %v893
    %1022 = vst [vmem:[#allocation7 + $0xa8] sm:$0xf] %v894
    %1023 = vst [vmem:[#allocation7 + $0xac] sm:$0xf] %v895
    %1024 = vst [vmem:[#allocation7 + $0xb0] sm:$0xf] %v896
    %1025 = vst [vmem:[#allocation7 + $0xb4] sm:$0xf] %v897
    %1026 = vst [vmem:[#allocation7 + $0xb8] sm:$0xf] %v898
    %1027 = vst [vmem:[#allocation7 + $0xbc] sm:$0xf] %v899
    %1028 = vst [vmem:[#allocation7 + $0xc0] sm:$0xf] %v900
    %1029 = vst [vmem:[#allocation7 + $0xc4] sm:$0xf] %v901
    %1030 = vst [vmem:[#allocation7 + $0xc8] sm:$0xf] %v902
    %1031 = vst [vmem:[#allocation7 + $0xcc] sm:$0xf] %v903
    %1032 = vst [vmem:[#allocation7 + $0xd0] sm:$0xf] %v904
    %1033 = vst [vmem:[#allocation7 + $0xd4] sm:$0xf] %v905
    %1034 = vst [vmem:[#allocation7 + $0xd8] sm:$0xf] %v906
    %1035 = vst [vmem:[#allocation7 + $0xdc] sm:$0xf] %v907
    %1036 = vst [vmem:[#allocation7 + $0xe0] sm:$0xf] %v908
    %1037 = vst [vmem:[#allocation7 + $0xe4] sm:$0xf] %v909
    %1038 = vst [vmem:[#allocation7 + $0xe8] sm:$0xf] %v910
    %1039 = vst [vmem:[#allocation7 + $0xec] sm:$0xf] %v911
    %1040 = vst [vmem:[#allocation7 + $0xf0] sm:$0xf] %v912
    %1041 = vst [vmem:[#allocation7 + $0xf4] sm:$0xf] %v913
    %1042 = vst [vmem:[#allocation7 + $0xf8] sm:$0xf] %v914
    %1043 = vst [vmem:[#allocation7 + $0xfc] sm:$0xf] %v915
    // Predicated region
    $region22: #{tpu_custom_call.1} parent=1 // pred_check
      _
    $region23: #{tpu_custom_call.1} parent=1 // pred_check_branch
      %1045 = sbr.rel (0) target = $region25
    $region24: #{tpu_custom_call.1} parent=1 // pred_region
      %s1047 = ssub.s32 4096, 4096
      %1048 = vsyncadd [#allocation4], %s1047
      %s1049 = sshll.u32 [#allocation7], 4
      %s1050 = int_to_ptr.vmem [resolvable:$true] %s1049
      %1055 = dma.vmem_to_hbm [thread:$0]  %s1050, 4096, %s3, [#allocation4], 64, 64, 4
    $region25: #{tpu_custom_call.1} parent=1 // pred_fallthru
      _
    // Predicated region
    $region26: #{tpu_custom_call.1} parent=1 // pred_check
      _
    $region27: #{tpu_custom_call.1} parent=1 // pred_check_branch
      %1057 = sbr.rel (0) target = $region29
    $region28: #{tpu_custom_call.1} parent=1 // pred_region
      %1058 = dma.done [#allocation4], 4096
    $region29: #{tpu_custom_call.1} parent=1 // pred_fallthru
      _
    %1059 = vsyncpa [#allocation3], 1
    %1060 = vsyncpa [#allocation6], 1
    %1061 = vsyncpa [#allocation4], 1

</llo_original>
